<compile_context>
chip_gen: v7x
topology: tpu7x:2x2x1
jax: 0.10.0
libtpu: 0.0.40
codegen_flags: <defaults>
</compile_context>

<pallas_src>
import jax
import jax.numpy as jnp
from jax.experimental import pallas as pl
from jax.experimental.pallas import tpu as pltpu


_LANE = 1024          # wide lane-dense slab (vs. 128): biggest single lever measured
_MAX_TILE_ROWS = 512  # (512, 1024) f32 = 2 MiB/buffer -> double-buffered in+out ~8 MiB


def _affine_kernel(w_ref, b_ref, x_ref, o_ref):
    # w_ref / b_ref: (1,) f32 scalars in SMEM. x_ref / o_ref: VMEM tiles.
    w = w_ref[0]
    b = b_ref[0]
    o_ref[...] = (w * x_ref[...] + b).astype(o_ref.dtype)


def py_params_forward(x, weights, bias):
    """JAX/Pallas equivalent of PyParams.forward: weights * x + bias.

    weights, bias: shape (1,) float32 parameters (broadcast elementwise).
    x: any shape / float dtype.
    """
    orig_shape = x.shape
    n = x.size

    # Choose the widest lane-dense width that divides n exactly so the common
    # path never copies the tensor in the wrapper (pad+slice would roughly
    # double HBM traffic for this memory-bound op).
    lane = None
    for cand in (_LANE, 512, 256, 128):
        if n % cand == 0:
            lane = cand
            break

    x_flat = x.reshape(-1)
    pad = 0
    if lane is None:
        # Ragged fallback only: pad the flat tail to a 128-multiple.
        lane = 128
        pad = (-n) % lane
        x_flat = jnp.concatenate([x_flat, jnp.zeros((pad,), x.dtype)])

    rows = x_flat.size // lane
    x2d = x_flat.reshape(rows, lane)

    tile_rows = min(_MAX_TILE_ROWS, rows)
    grid = (pl.cdiv(rows, tile_rows),)

    out2d = pl.pallas_call(
        _affine_kernel,
        out_shape=jax.ShapeDtypeStruct((rows, lane), x.dtype),
        grid=grid,
        in_specs=[
            pl.BlockSpec(memory_space=pltpu.SMEM),             # weights (1,)
            pl.BlockSpec(memory_space=pltpu.SMEM),             # bias    (1,)
            pl.BlockSpec((tile_rows, lane), lambda i: (i, 0)),  # x tile
        ],
        out_specs=pl.BlockSpec((tile_rows, lane), lambda i: (i, 0)),
        compiler_params=pltpu.CompilerParams(
            dimension_semantics=("parallel",),
        ),
        cost_estimate=pl.CostEstimate(
            flops=2 * n,
            transcendentals=0,
            bytes_accessed=2 * n * x.dtype.itemsize,
        ),
    )(weights, bias, x2d)

    out_flat = out2d.reshape(-1)
    if pad:
        out_flat = out_flat[:n]
    return out_flat.reshape(orig_shape)


if __name__ == "__main__":
    key = jax.random.PRNGKey(0)
    k_w, k_b, k_x, k_y = jax.random.split(key, 4)

    # Parameters match nn.Parameter(torch.randn(1)).
    weights = jax.random.normal(k_w, (1,), dtype=jnp.float32)
    bias = jax.random.normal(k_b, (1,), dtype=jnp.float32)

    # Small example input (forward is an elementwise broadcast, any shape works).
    x = jax.random.normal(k_x, (2, 4, 16, 16), dtype=jnp.float32)
    out = jax.block_until_ready(py_params_forward(x, weights, bias))
    ref = weights * x + bias
    assert out.shape == x.shape
    assert jnp.allclose(out, ref, atol=1e-6, rtol=1e-6)

    # Ragged-size path (no lane-dense width divides 105 -> fallback branch).
    y = jax.random.normal(k_y, (3, 5, 7), dtype=jnp.float32)
    out_y = jax.block_until_ready(py_params_forward(y, weights, bias))
    ref_y = weights * y + bias
    assert out_y.shape == y.shape
    assert jnp.allclose(out_y, ref_y, atol=1e-6, rtol=1e-6)

    print("KERNEL_OK")
</pallas_src>

<mosaic_0001>
module attributes {stable_mosaic.version = 11 : i64} {
  func.func @_affine_kernel(%arg0: i32, %arg1: memref<1xf32, #tpu.memory_space<smem>>, %arg2: memref<1xf32, #tpu.memory_space<smem>>, %arg3: memref<2x1024xf32, #tpu.memory_space<vmem>>, %arg4: memref<2x1024xf32, #tpu.memory_space<vmem>>) attributes {dimension_semantics = [#tpu.dimension_semantics<parallel>], iteration_bounds = array<i64: 1>, scalar_prefetch = 0 : i64, scratch_operands = 0 : i64, tpu.core_type = #tpu.core_type<tc>, window_params = [{transform_indices = @transform_0, window_bounds = array<i64: 1>}, {transform_indices = @transform_1, window_bounds = array<i64: 1>}, {transform_indices = @transform_2, window_bounds = array<i64: 2, 1024>}, {transform_indices = @transform_3, window_bounds = array<i64: 2, 1024>}]} {
    %c0 = arith.constant 0 : index
    %0 = memref.load %arg1[%c0] : memref<1xf32, #tpu.memory_space<smem>>
    %c0_0 = arith.constant 0 : index
    %1 = memref.load %arg2[%c0_0] : memref<1xf32, #tpu.memory_space<smem>>
    %c0_1 = arith.constant 0 : index
    %c0_2 = arith.constant 0 : index
    %2 = vector.load %arg3[%c0_1, %c0_2] : memref<2x1024xf32, #tpu.memory_space<vmem>>, vector<2x1024xf32>
    %3 = vector.broadcast %0 : f32 to vector<2x1024xf32>
    %4 = arith.mulf %3, %2 : vector<2x1024xf32>
    %5 = vector.broadcast %1 : f32 to vector<2x1024xf32>
    %6 = arith.addf %4, %5 : vector<2x1024xf32>
    %c0_3 = arith.constant 0 : index
    %c0_4 = arith.constant 0 : index
    %7 = vector.load %arg4[%c0_3, %c0_4] : memref<2x1024xf32, #tpu.memory_space<vmem>>, vector<2x1024xf32>
    tpu.vector_store %arg4[%c0_3, %c0_4], %6 {strides = array<i32>} : memref<2x1024xf32, #tpu.memory_space<vmem>>, vector<2x1024xf32>,
    return
  }
  func.func @transform_0(%arg0: i32) -> i32 {
    %c0_i32 = arith.constant 0 : i32
    %c0_i32_0 = arith.constant 0 : i32
    return %c0_i32 : i32
  }
  func.func @transform_1(%arg0: i32) -> i32 {
    %c0_i32 = arith.constant 0 : i32
    %c0_i32_0 = arith.constant 0 : i32
    return %c0_i32 : i32
  }
  func.func @transform_2(%arg0: i32) -> (i32, i32) {
    %c0_i32 = arith.constant 0 : i32
    %c0_i32_0 = arith.constant 0 : i32
    return %arg0, %c0_i32 : i32, i32
  }
  func.func @transform_3(%arg0: i32) -> (i32, i32) {
    %c0_i32 = arith.constant 0 : i32
    %c0_i32_0 = arith.constant 0 : i32
    return %arg0, %c0_i32 : i32, i32
  }
}

</mosaic_0001>

<llo_original>
// kernel: tpu_custom_call.1
$region0: #{tpu_custom_call.1}
  #allocation0 [shape = 'u32[]', space=smem, size = 0x4, offset = 0x4, fixed_abs, tag = 'smem constant byte address 0x4 - core index']
  #allocation1 [shape = 'u32[144,128]{1,0:T(1,128)}', space=vmem, size = 0x12000, scoped, tag = 'internal scratch']
  #allocation2 [shape = 'f32[1]{0:T(128)S(6)}', space=smem, size = 0x200, scoped, tag = 'scoped memory for tpu_custom_call.1']
  #allocation3 [shape = 'f32[1]{0:T(128)S(6)}', space=smem, size = 0x200, scoped, tag = 'scoped memory for tpu_custom_call.1']
  %s0 = inlined_call_operand.<no memory space> [shape: f32[1], index: 0, kind: input, shape index: {}]
  %s1 = inlined_call_operand.<no memory space> [shape: f32[1], index: 1, kind: input, shape index: {}]
  %s2 = inlined_call_operand.hbm [shape: f32[2,1024], index: 2, kind: input, shape index: {}]
  %s3 = inlined_call_operand.hbm [shape: f32[2,1024], index: 3, kind: output, shape index: {}]
  %s4 = sld [smem:[#allocation0]]
  $region26: #{tpu_custom_call.1} parent=0
    _
  %s6 = ssub.s32 1, %s4
  %s7 = scalar_select 0, %s6, %s4
  %8 = sst [smem:[#allocation2]] %s0
  %9 = sst [smem:[#allocation3]] %s1
  $region1: #{tpu_custom_call.1} parent=0
    #allocation4 [shape = 'u8[8192]{0}', space=vmem, size = 0x2000, scoped, tag = 'input window, operand 2, single buffered']
    #allocation5 [shape = 's32[1]{0}', space=sflag, size = 0x4, scoped, tag = 'scoped memory for tpu_custom_call.1']
    #allocation6 [shape = 's32[1]{0}', space=sflag, size = 0x4, scoped, tag = 'scoped memory for tpu_custom_call.1']
    #allocation7 [shape = 'u8[8192]{0}', space=vmem, size = 0x2000, scoped, tag = 'output window, operand 0, single buffered']
    %10 = vsyncpa [#allocation5], 0
    %11 = vsyncpa [#allocation6], 0
    // Predicated region
    $region2: #{tpu_custom_call.1} parent=1 // pred_check
      _
    $region3: #{tpu_custom_call.1} parent=1 // pred_check_branch
      %13 = sbr.rel (0) target = $region5
    $region4: #{tpu_custom_call.1} parent=1 // pred_region
      _
    $region5: #{tpu_custom_call.1} parent=1 // pred_fallthru
      _
    // Predicated region
    $region6: #{tpu_custom_call.1} parent=1 // pred_check
      _
    $region7: #{tpu_custom_call.1} parent=1 // pred_check_branch
      %15 = sbr.rel (0) target = $region9
    $region8: #{tpu_custom_call.1} parent=1 // pred_region
      _
    $region9: #{tpu_custom_call.1} parent=1 // pred_fallthru
      _
    // Predicated region
    $region10: #{tpu_custom_call.1} parent=1 // pred_check
      _
    $region11: #{tpu_custom_call.1} parent=1 // pred_check_branch
      %17 = sbr.rel (0) target = $region13
    $region12: #{tpu_custom_call.1} parent=1 // pred_region
      %s19 = ssub.s32 256, 256
      %20 = vsyncadd [#allocation5], %s19
      %s22 = sshll.u32 [#allocation4], 4
      %s23 = int_to_ptr.vmem [resolvable:$true] %s22
      %25 = dma.hbm_to_vmem [thread:$0]  %s2, 256, %s23, [#allocation5]
    $region13: #{tpu_custom_call.1} parent=1 // pred_fallthru
      _
    // Predicated region
    $region14: #{tpu_custom_call.1} parent=1 // pred_check
      _
    $region15: #{tpu_custom_call.1} parent=1 // pred_check_branch
      %27 = sbr.rel (0) target = $region17
    $region16: #{tpu_custom_call.1} parent=1 // pred_region
      %28 = dma.done [#allocation5], 256
    $region17: #{tpu_custom_call.1} parent=1 // pred_fallthru
      _
    %s29 = sld [smem:[#allocation2]]
    %s30 = sld [smem:[#allocation3]]
    %v31 = vld [vmem:[#allocation4] sm:$0xff]
    %v32 = vld [vmem:[#allocation4 + $0x8] sm:$0xff]
    %v33 = vstv %s29
    %v34 = vmul.f32 %v33, %v31
    %v35 = vmul.f32 %v33, %v32
    %v36 = vstv %s30
    %v37 = vadd.f32 %v34, %v36
    %v38 = vadd.f32 %v35, %v36
    %39 = vst [vmem:[#allocation7] sm:$0xff] %v37
    %40 = vst [vmem:[#allocation7 + $0x8] sm:$0xff] %v38
    // Predicated region
    $region18: #{tpu_custom_call.1} parent=1 // pred_check
      _
    $region19: #{tpu_custom_call.1} parent=1 // pred_check_branch
      %42 = sbr.rel (0) target = $region21
    $region20: #{tpu_custom_call.1} parent=1 // pred_region
      %s44 = ssub.s32 256, 256
      %45 = vsyncadd [#allocation6], %s44
      %s47 = sshll.u32 [#allocation7], 4
      %s48 = int_to_ptr.vmem [resolvable:$true] %s47
      %50 = dma.vmem_to_hbm [thread:$0]  %s48, 256, %s3, [#allocation6]
    $region21: #{tpu_custom_call.1} parent=1 // pred_fallthru
      _
    // Predicated region
    $region22: #{tpu_custom_call.1} parent=1 // pred_check
      _
    $region23: #{tpu_custom_call.1} parent=1 // pred_check_branch
      %52 = sbr.rel (0) target = $region25
    $region24: #{tpu_custom_call.1} parent=1 // pred_region
      %53 = dma.done [#allocation6], 256
    $region25: #{tpu_custom_call.1} parent=1 // pred_fallthru
      _
    %54 = vsyncpa [#allocation5], 1
    %55 = vsyncpa [#allocation6], 1

</llo_original>
